<compile_context>
chip_gen: v5e
topology: v5e:2x2
jax: 0.10.0
libtpu: 0.0.40
codegen_flags: <defaults>
</compile_context>

<pallas_src>
import jax
import jax.numpy as jnp
import numpy as np
from jax.experimental import pallas as pl
from jax.experimental.pallas import tpu as pltpu


def _basic_block_kernel(x_ref, t1_ref, t2_ref, b1_ref, b2_ref,
                        out_ref, xpad_ref, mid_ref):
    """Fused residual basic block for one image (one grid step).

    x_ref   : (1, H, W*Cin)        input rows, channels folded into W (f32)
    t1_ref  : (3, (W+2)*Cin, W*Cout) banded conv1 weights (BN1 scale folded)
    t2_ref  : (3, (W+2)*Cout, W*Cout) banded conv2 weights (BN2 scale folded)
    b1_ref  : (1, W*Cout)          BN1 bias tiled over W (f32)
    b2_ref  : (1, W*Cout)          BN2 bias tiled over W (f32)
    out_ref : (1, H, W*Cout)
    xpad_ref: VMEM (H+2, (W+2)*Cin)  zero-padded input scratch (f32)
    mid_ref : VMEM (H+2, (W+2)*Cout) zero-padded intermediate scratch (f32)
    """
    H = x_ref.shape[1]
    WCin = x_ref.shape[2]
    WCout = out_ref.shape[2]
    Kp1 = xpad_ref.shape[1]          # (W+2)*Cin
    Kp2 = mid_ref.shape[1]           # (W+2)*Cout
    Cin = (Kp1 - WCin) // 2
    Cout = (Kp2 - WCout) // 2
    Hp2 = H + 2
    mdt = t1_ref.dtype               # MXU input dtype (bf16 or f32)

    # ---- stage zero-padded input: rows are [0(Cin) | x row | 0(Cin)] ----
    # Only the halo strips are zeroed (per step: safe under megacore), the
    # interior is fully overwritten.
    xpad_ref[0:1, :] = jnp.zeros((1, Kp1), jnp.float32)
    xpad_ref[Hp2 - 1:Hp2, :] = jnp.zeros((1, Kp1), jnp.float32)
    xpad_ref[:, 0:Cin] = jnp.zeros((Hp2, Cin), jnp.float32)
    xpad_ref[:, Kp1 - Cin:Kp1] = jnp.zeros((Hp2, Cin), jnp.float32)
    x = x_ref[0]                                     # (H, W*Cin), f32
    xpad_ref[1:H + 1, Cin:Cin + WCin] = x

    # ---- conv1 (3x3, pad 1, no bias; BN1 scale folded into t1) ----
    acc1 = jnp.zeros((H, WCout), jnp.float32)
    for dy in range(3):
        acc1 = acc1 + jnp.dot(xpad_ref[dy:dy + H, :].astype(mdt), t1_ref[dy],
                              preferred_element_type=jnp.float32)
    h = jnp.maximum(acc1 + b1_ref[...], 0.0)         # BN1 bias + ReLU

    # ---- stage zero-padded intermediate ----
    mid_ref[0:1, :] = jnp.zeros((1, Kp2), jnp.float32)
    mid_ref[Hp2 - 1:Hp2, :] = jnp.zeros((1, Kp2), jnp.float32)
    mid_ref[:, 0:Cout] = jnp.zeros((Hp2, Cout), jnp.float32)
    mid_ref[:, Kp2 - Cout:Kp2] = jnp.zeros((Hp2, Cout), jnp.float32)
    mid_ref[1:H + 1, Cout:Cout + WCout] = h

    # ---- conv2 (BN2 scale folded into t2) + residual add + ReLU ----
    acc2 = jnp.zeros((H, WCout), jnp.float32)
    for dy in range(3):
        acc2 = acc2 + jnp.dot(mid_ref[dy:dy + H, :].astype(mdt), t2_ref[dy],
                              preferred_element_type=jnp.float32)
    out = acc2 + b2_ref[...] + x                     # identity (Cin == Cout)
    out_ref[0] = jnp.maximum(out, 0.0).astype(out_ref.dtype)


def _fold_bn_into_weight(w_oihw, bn, eps):
    """Fold BN scale into conv weight columns; return (HWIO weight, bias)."""
    gamma, beta, mean, var = bn
    scale = gamma / jnp.sqrt(var + eps)
    bias = beta - mean * scale
    w = jnp.transpose(w_oihw, (2, 3, 1, 0)).astype(jnp.float32)   # (3,3,Ci,Co)
    w = w * scale.reshape(1, 1, 1, -1)
    return w, bias.astype(jnp.float32)


def _banded_weights(w_hwio, W):
    """(3,3,Ci,Co) -> (3, (W+2)*Ci, W*Co) banded row-matmul weights."""
    _, _, Ci, Co = w_hwio.shape
    Wp = W + 2
    # placement P[dx, wi, wo] = 1  iff  wi == wo + dx   (static constant)
    wo = np.arange(W)
    P = np.zeros((3, Wp, W), np.float32)
    for dx in range(3):
        P[dx, wo + dx, wo] = 1.0
    P = jnp.asarray(P)
    # T[dy, wi, ci, wo, co] = sum_dx P[dx, wi, wo] * w[dy, dx, ci, co]
    T = jnp.einsum('xiw,yxcd->yicwd', P, w_hwio)
    return T.reshape(3, Wp * Ci, W * Co)


def dense2d_basic_block(x_nchw, w1_oihw, w2_oihw, bn1, bn2, eps=1e-3,
                        compute_dtype=jnp.bfloat16):
    """Wrapper: NCHW in / NCHW out, matching the PyTorch module (eval-mode BN)."""
    N, Cin, H, W = x_nchw.shape
    Cout = w1_oihw.shape[0]
    assert Cin == Cout, "residual add requires inplanes == planes (stride=1)"
    Wp = W + 2

    # NCHW -> (N, H, W*Cin): channels-last, W folded into the lane dim (free
    # reshape, contiguous in HBM). Read exactly once by the kernel (serves as
    # both conv1 input and residual identity).
    x = jnp.transpose(x_nchw, (0, 2, 3, 1)).astype(jnp.float32)
    x = x.reshape(N, H, W * Cin)

    w1f, bias1 = _fold_bn_into_weight(w1_oihw, bn1, eps)
    w2f, bias2 = _fold_bn_into_weight(w2_oihw, bn2, eps)
    t1 = _banded_weights(w1f, W).astype(compute_dtype)   # (3, Wp*Cin, W*Cout)
    t2 = _banded_weights(w2f, W).astype(compute_dtype)   # (3, Wp*Cout, W*Cout)
    b1 = jnp.tile(bias1, W).reshape(1, W * Cout)
    b2 = jnp.tile(bias2, W).reshape(1, W * Cout)

    out_flat = pl.pallas_call(
        _basic_block_kernel,
        out_shape=jax.ShapeDtypeStruct((N, H, W * Cout), jnp.float32),
        grid=(N,),
        in_specs=[
            pl.BlockSpec((1, H, W * Cin), lambda n: (n, 0, 0)),
            pl.BlockSpec(t1.shape, lambda n: (0, 0, 0)),
            pl.BlockSpec(t2.shape, lambda n: (0, 0, 0)),
            pl.BlockSpec((1, W * Cout), lambda n: (0, 0)),
            pl.BlockSpec((1, W * Cout), lambda n: (0, 0)),
        ],
        out_specs=pl.BlockSpec((1, H, W * Cout), lambda n: (n, 0, 0)),
        scratch_shapes=[
            pltpu.VMEM((H + 2, Wp * Cin), jnp.float32),
            pltpu.VMEM((H + 2, Wp * Cout), jnp.float32),
        ],
        compiler_params=pltpu.CompilerParams(
            dimension_semantics=("parallel",)),
    )(x, t1, t2, b1, b2)

    out = out_flat.reshape(N, H, W, Cout)            # free reshape
    return jnp.transpose(out, (0, 3, 1, 2))          # back to NCHW


def _reference(x_nchw, w1_oihw, w2_oihw, bn1, bn2, eps=1e-3):
    """Pure-JAX reference matching the PyTorch forward (BN in eval mode)."""
    x = jnp.transpose(x_nchw, (0, 2, 3, 1)).astype(jnp.float32)
    w1 = jnp.transpose(w1_oihw, (2, 3, 1, 0)).astype(jnp.float32)
    w2 = jnp.transpose(w2_oihw, (2, 3, 1, 0)).astype(jnp.float32)
    dn = ('NHWC', 'HWIO', 'NHWC')

    def bn(y, params):
        g, b, m, v = params
        return (y - m) / jnp.sqrt(v + eps) * g + b

    out = jax.lax.conv_general_dilated(x, w1, (1, 1), 'SAME',
                                       dimension_numbers=dn)
    out = jnp.maximum(bn(out, bn1), 0.0)
    out = jax.lax.conv_general_dilated(out, w2, (1, 1), 'SAME',
                                       dimension_numbers=dn)
    out = bn(out, bn2) + x
    out = jnp.maximum(out, 0.0)
    return jnp.transpose(out, (0, 3, 1, 2))


if __name__ == "__main__":
    # Small shapes: batch=2, inplanes=planes=4, spatial 16x16, stride=1.
    N, C, H, W = 2, 4, 16, 16
    key = jax.random.PRNGKey(0)
    kx, kw1, kw2 = jax.random.split(key, 3)

    x = jax.random.normal(kx, (N, C, H, W), jnp.float32)
    # Conv weights in PyTorch OIHW layout: (planes, inplanes, 3, 3)
    w1 = 0.1 * jax.random.normal(kw1, (C, C, 3, 3), jnp.float32)
    w2 = 0.1 * jax.random.normal(kw2, (C, C, 3, 3), jnp.float32)

    # Deterministic BN parameters: (gamma, beta, running_mean, running_var)
    idx = jnp.arange(C, dtype=jnp.float32)
    bn1 = (1.0 + 0.10 * idx, 0.01 * idx, 0.05 * idx, 1.0 + 0.02 * idx)
    bn2 = (1.0 - 0.05 * idx, -0.02 * idx, 0.03 * idx, 1.0 + 0.04 * idx)

    ref = _reference(x, w1, w2, bn1, bn2, eps=1e-3)

    # Exact-precision path (f32 MXU inputs) — tight tolerance.
    out_f32 = dense2d_basic_block(x, w1, w2, bn1, bn2, eps=1e-3,
                                  compute_dtype=jnp.float32)
    out_f32 = jax.block_until_ready(out_f32)
    np.testing.assert_allclose(np.asarray(out_f32), np.asarray(ref),
                               rtol=1e-4, atol=1e-4)

    # Fast path (bf16 MXU inputs, f32 accumulation) for v6e / v7x.
    out_bf16 = dense2d_basic_block(x, w1, w2, bn1, bn2, eps=1e-3,
                                   compute_dtype=jnp.bfloat16)
    out_bf16 = jax.block_until_ready(out_bf16)
    np.testing.assert_allclose(np.asarray(out_bf16), np.asarray(ref),
                               rtol=5e-2, atol=5e-2)

    print("KERNEL_OK")
</pallas_src>

<mosaic_0001>
module attributes {stable_mosaic.version = 11 : i64} {
  func.func @_basic_block_kernel(%arg0: i32, %arg1: memref<1x16x64xf32, #tpu.memory_space<vmem>>, %arg2: memref<3x72x64xf32, #tpu.memory_space<vmem>>, %arg3: memref<3x72x64xf32, #tpu.memory_space<vmem>>, %arg4: memref<1x64xf32, #tpu.memory_space<vmem>>, %arg5: memref<1x64xf32, #tpu.memory_space<vmem>>, %arg6: memref<1x16x64xf32, #tpu.memory_space<vmem>>, %arg7: memref<18x72xf32, #tpu.memory_space<vmem>>, %arg8: memref<18x72xf32, #tpu.memory_space<vmem>>) attributes {dimension_semantics = [#tpu.dimension_semantics<parallel>], iteration_bounds = array<i64: 2>, scalar_prefetch = 0 : i64, scratch_operands = 2 : i64, tpu.core_type = #tpu.core_type<tc>, window_params = [{transform_indices = @transform_0, window_bounds = array<i64: 1, 16, 64>}, {pipeline_mode = #tpu.pipeline_mode<synchronous>, transform_indices = @transform_1, window_bounds = array<i64: 3, 72, 64>}, {pipeline_mode = #tpu.pipeline_mode<synchronous>, transform_indices = @transform_2, window_bounds = array<i64: 3, 72, 64>}, {pipeline_mode = #tpu.pipeline_mode<synchronous>, transform_indices = @transform_3, window_bounds = array<i64: 1, 64>}, {pipeline_mode = #tpu.pipeline_mode<synchronous>, transform_indices = @transform_4, window_bounds = array<i64: 1, 64>}, {transform_indices = @transform_5, window_bounds = array<i64: 1, 16, 64>}]} {
    %cst = arith.constant 0.000000e+00 : f32
    %0 = vector.broadcast %cst : f32 to vector<1x72xf32>
    %c0 = arith.constant 0 : index
    %c0_0 = arith.constant 0 : index
    %1 = vector.load %arg7[%c0, %c0_0] : memref<18x72xf32, #tpu.memory_space<vmem>>, vector<1x72xf32>
    tpu.vector_store %arg7[%c0, %c0_0], %0 {strides = array<i32>} : memref<18x72xf32, #tpu.memory_space<vmem>>, vector<1x72xf32>,
    %cst_1 = arith.constant 0.000000e+00 : f32
    %2 = vector.broadcast %cst_1 : f32 to vector<1x72xf32>
    %c17 = arith.constant 17 : index
    %c0_2 = arith.constant 0 : index
    %3 = vector.load %arg7[%c17, %c0_2] : memref<18x72xf32, #tpu.memory_space<vmem>>, vector<1x72xf32>
    tpu.vector_store %arg7[%c17, %c0_2], %2 {strides = array<i32>} : memref<18x72xf32, #tpu.memory_space<vmem>>, vector<1x72xf32>,
    %cst_3 = arith.constant 0.000000e+00 : f32
    %4 = vector.broadcast %cst_3 : f32 to vector<18x4xf32>
    %c0_4 = arith.constant 0 : index
    %c0_5 = arith.constant 0 : index
    %5 = vector.load %arg7[%c0_4, %c0_5] : memref<18x72xf32, #tpu.memory_space<vmem>>, vector<18x4xf32>
    tpu.vector_store %arg7[%c0_4, %c0_5], %4 {strides = array<i32>} : memref<18x72xf32, #tpu.memory_space<vmem>>, vector<18x4xf32>,
    %cst_6 = arith.constant 0.000000e+00 : f32
    %6 = vector.broadcast %cst_6 : f32 to vector<18x4xf32>
    %c0_7 = arith.constant 0 : index
    %c68 = arith.constant 68 : index
    %7 = vector.load %arg7[%c0_7, %c68] : memref<18x72xf32, #tpu.memory_space<vmem>>, vector<18x4xf32>
    tpu.vector_store %arg7[%c0_7, %c68], %6 {strides = array<i32>} : memref<18x72xf32, #tpu.memory_space<vmem>>, vector<18x4xf32>,
    %c0_8 = arith.constant 0 : index
    %c0_9 = arith.constant 0 : index
    %c0_10 = arith.constant 0 : index
    %8 = vector.load %arg1[%c0_8, %c0_9, %c0_10] : memref<1x16x64xf32, #tpu.memory_space<vmem>>, vector<1x16x64xf32>
    %9 = vector.shape_cast %8 : vector<1x16x64xf32> to vector<16x64xf32>
    %c1 = arith.constant 1 : index
    %c4 = arith.constant 4 : index
    %10 = vector.load %arg7[%c1, %c4] : memref<18x72xf32, #tpu.memory_space<vmem>>, vector<16x64xf32>
    tpu.vector_store %arg7[%c1, %c4], %9 {strides = array<i32>} : memref<18x72xf32, #tpu.memory_space<vmem>>, vector<16x64xf32>,
    %cst_11 = arith.constant 0.000000e+00 : f32
    %11 = vector.broadcast %cst_11 : f32 to vector<16x64xf32>
    %c0_12 = arith.constant 0 : index
    %c0_13 = arith.constant 0 : index
    %12 = vector.load %arg7[%c0_12, %c0_13] : memref<18x72xf32, #tpu.memory_space<vmem>>, vector<16x72xf32>
    %c0_14 = arith.constant 0 : index
    %c0_15 = arith.constant 0 : index
    %c0_16 = arith.constant 0 : index
    %13 = vector.load %arg2[%c0_14, %c0_15, %c0_16] : memref<3x72x64xf32, #tpu.memory_space<vmem>>, vector<1x72x64xf32>
    %14 = vector.shape_cast %13 : vector<1x72x64xf32> to vector<72x64xf32>
    %cst_17 = arith.constant dense<0.000000e+00> : vector<16x64xf32>
    %15 = tpu.matmul %12, %14, %cst_17 {dimension_numbers = #tpu.dot_dimension_numbers<[1], [0], [0], [1], [0, 0, 1, 1], [], []>} : vector<16x72xf32>, vector<72x64xf32>, vector<16x64xf32> -> vector<16x64xf32>
    %16 = arith.addf %11, %15 : vector<16x64xf32>
    %c1_18 = arith.constant 1 : index
    %c0_19 = arith.constant 0 : index
    %17 = vector.load %arg7[%c1_18, %c0_19] : memref<18x72xf32, #tpu.memory_space<vmem>>, vector<16x72xf32>
    %c1_20 = arith.constant 1 : index
    %c0_21 = arith.constant 0 : index
    %c0_22 = arith.constant 0 : index
    %18 = vector.load %arg2[%c1_20, %c0_21, %c0_22] : memref<3x72x64xf32, #tpu.memory_space<vmem>>, vector<1x72x64xf32>
    %19 = vector.shape_cast %18 : vector<1x72x64xf32> to vector<72x64xf32>
    %cst_23 = arith.constant dense<0.000000e+00> : vector<16x64xf32>
    %20 = tpu.matmul %17, %19, %cst_23 {dimension_numbers = #tpu.dot_dimension_numbers<[1], [0], [0], [1], [0, 0, 1, 1], [], []>} : vector<16x72xf32>, vector<72x64xf32>, vector<16x64xf32> -> vector<16x64xf32>
    %21 = arith.addf %16, %20 : vector<16x64xf32>
    %c2 = arith.constant 2 : index
    %c0_24 = arith.constant 0 : index
    %22 = vector.load %arg7[%c2, %c0_24] : memref<18x72xf32, #tpu.memory_space<vmem>>, vector<16x72xf32>
    %c2_25 = arith.constant 2 : index
    %c0_26 = arith.constant 0 : index
    %c0_27 = arith.constant 0 : index
    %23 = vector.load %arg2[%c2_25, %c0_26, %c0_27] : memref<3x72x64xf32, #tpu.memory_space<vmem>>, vector<1x72x64xf32>
    %24 = vector.shape_cast %23 : vector<1x72x64xf32> to vector<72x64xf32>
    %cst_28 = arith.constant dense<0.000000e+00> : vector<16x64xf32>
    %25 = tpu.matmul %22, %24, %cst_28 {dimension_numbers = #tpu.dot_dimension_numbers<[1], [0], [0], [1], [0, 0, 1, 1], [], []>} : vector<16x72xf32>, vector<72x64xf32>, vector<16x64xf32> -> vector<16x64xf32>
    %26 = arith.addf %21, %25 : vector<16x64xf32>
    %c0_29 = arith.constant 0 : index
    %c0_30 = arith.constant 0 : index
    %27 = vector.load %arg4[%c0_29, %c0_30] : memref<1x64xf32, #tpu.memory_space<vmem>>, vector<1x64xf32>
    %28 = vector.broadcast %27 : vector<1x64xf32> to vector<16x64xf32>
    %29 = arith.addf %26, %28 : vector<16x64xf32>
    %cst_31 = arith.constant 0.000000e+00 : f32
    %30 = vector.broadcast %cst_31 : f32 to vector<16x64xf32>
    %31 = arith.maximumf %29, %30 : vector<16x64xf32>
    %cst_32 = arith.constant 0.000000e+00 : f32
    %32 = vector.broadcast %cst_32 : f32 to vector<1x72xf32>
    %c0_33 = arith.constant 0 : index
    %c0_34 = arith.constant 0 : index
    %33 = vector.load %arg8[%c0_33, %c0_34] : memref<18x72xf32, #tpu.memory_space<vmem>>, vector<1x72xf32>
    tpu.vector_store %arg8[%c0_33, %c0_34], %32 {strides = array<i32>} : memref<18x72xf32, #tpu.memory_space<vmem>>, vector<1x72xf32>,
    %cst_35 = arith.constant 0.000000e+00 : f32
    %34 = vector.broadcast %cst_35 : f32 to vector<1x72xf32>
    %c17_36 = arith.constant 17 : index
    %c0_37 = arith.constant 0 : index
    %35 = vector.load %arg8[%c17_36, %c0_37] : memref<18x72xf32, #tpu.memory_space<vmem>>, vector<1x72xf32>
    tpu.vector_store %arg8[%c17_36, %c0_37], %34 {strides = array<i32>} : memref<18x72xf32, #tpu.memory_space<vmem>>, vector<1x72xf32>,
    %cst_38 = arith.constant 0.000000e+00 : f32
    %36 = vector.broadcast %cst_38 : f32 to vector<18x4xf32>
    %c0_39 = arith.constant 0 : index
    %c0_40 = arith.constant 0 : index
    %37 = vector.load %arg8[%c0_39, %c0_40] : memref<18x72xf32, #tpu.memory_space<vmem>>, vector<18x4xf32>
    tpu.vector_store %arg8[%c0_39, %c0_40], %36 {strides = array<i32>} : memref<18x72xf32, #tpu.memory_space<vmem>>, vector<18x4xf32>,
    %cst_41 = arith.constant 0.000000e+00 : f32
    %38 = vector.broadcast %cst_41 : f32 to vector<18x4xf32>
    %c0_42 = arith.constant 0 : index
    %c68_43 = arith.constant 68 : index
    %39 = vector.load %arg8[%c0_42, %c68_43] : memref<18x72xf32, #tpu.memory_space<vmem>>, vector<18x4xf32>
    tpu.vector_store %arg8[%c0_42, %c68_43], %38 {strides = array<i32>} : memref<18x72xf32, #tpu.memory_space<vmem>>, vector<18x4xf32>,
    %c1_44 = arith.constant 1 : index
    %c4_45 = arith.constant 4 : index
    %40 = vector.load %arg8[%c1_44, %c4_45] : memref<18x72xf32, #tpu.memory_space<vmem>>, vector<16x64xf32>
    tpu.vector_store %arg8[%c1_44, %c4_45], %31 {strides = array<i32>} : memref<18x72xf32, #tpu.memory_space<vmem>>, vector<16x64xf32>,
    %cst_46 = arith.constant 0.000000e+00 : f32
    %41 = vector.broadcast %cst_46 : f32 to vector<16x64xf32>
    %c0_47 = arith.constant 0 : index
    %c0_48 = arith.constant 0 : index
    %42 = vector.load %arg8[%c0_47, %c0_48] : memref<18x72xf32, #tpu.memory_space<vmem>>, vector<16x72xf32>
    %c0_49 = arith.constant 0 : index
    %c0_50 = arith.constant 0 : index
    %c0_51 = arith.constant 0 : index
    %43 = vector.load %arg3[%c0_49, %c0_50, %c0_51] : memref<3x72x64xf32, #tpu.memory_space<vmem>>, vector<1x72x64xf32>
    %44 = vector.shape_cast %43 : vector<1x72x64xf32> to vector<72x64xf32>
    %cst_52 = arith.constant dense<0.000000e+00> : vector<16x64xf32>
    %45 = tpu.matmul %42, %44, %cst_52 {dimension_numbers = #tpu.dot_dimension_numbers<[1], [0], [0], [1], [0, 0, 1, 1], [], []>} : vector<16x72xf32>, vector<72x64xf32>, vector<16x64xf32> -> vector<16x64xf32>
    %46 = arith.addf %41, %45 : vector<16x64xf32>
    %c1_53 = arith.constant 1 : index
    %c0_54 = arith.constant 0 : index
    %47 = vector.load %arg8[%c1_53, %c0_54] : memref<18x72xf32, #tpu.memory_space<vmem>>, vector<16x72xf32>
    %c1_55 = arith.constant 1 : index
    %c0_56 = arith.constant 0 : index
    %c0_57 = arith.constant 0 : index
    %48 = vector.load %arg3[%c1_55, %c0_56, %c0_57] : memref<3x72x64xf32, #tpu.memory_space<vmem>>, vector<1x72x64xf32>
    %49 = vector.shape_cast %48 : vector<1x72x64xf32> to vector<72x64xf32>
    %cst_58 = arith.constant dense<0.000000e+00> : vector<16x64xf32>
    %50 = tpu.matmul %47, %49, %cst_58 {dimension_numbers = #tpu.dot_dimension_numbers<[1], [0], [0], [1], [0, 0, 1, 1], [], []>} : vector<16x72xf32>, vector<72x64xf32>, vector<16x64xf32> -> vector<16x64xf32>
    %51 = arith.addf %46, %50 : vector<16x64xf32>
    %c2_59 = arith.constant 2 : index
    %c0_60 = arith.constant 0 : index
    %52 = vector.load %arg8[%c2_59, %c0_60] : memref<18x72xf32, #tpu.memory_space<vmem>>, vector<16x72xf32>
    %c2_61 = arith.constant 2 : index
    %c0_62 = arith.constant 0 : index
    %c0_63 = arith.constant 0 : index
    %53 = vector.load %arg3[%c2_61, %c0_62, %c0_63] : memref<3x72x64xf32, #tpu.memory_space<vmem>>, vector<1x72x64xf32>
    %54 = vector.shape_cast %53 : vector<1x72x64xf32> to vector<72x64xf32>
    %cst_64 = arith.constant dense<0.000000e+00> : vector<16x64xf32>
    %55 = tpu.matmul %52, %54, %cst_64 {dimension_numbers = #tpu.dot_dimension_numbers<[1], [0], [0], [1], [0, 0, 1, 1], [], []>} : vector<16x72xf32>, vector<72x64xf32>, vector<16x64xf32> -> vector<16x64xf32>
    %56 = arith.addf %51, %55 : vector<16x64xf32>
    %c0_65 = arith.constant 0 : index
    %c0_66 = arith.constant 0 : index
    %57 = vector.load %arg5[%c0_65, %c0_66] : memref<1x64xf32, #tpu.memory_space<vmem>>, vector<1x64xf32>
    %58 = vector.broadcast %57 : vector<1x64xf32> to vector<16x64xf32>
    %59 = arith.addf %56, %58 : vector<16x64xf32>
    %60 = arith.addf %59, %9 : vector<16x64xf32>
    %cst_67 = arith.constant 0.000000e+00 : f32
    %61 = vector.broadcast %cst_67 : f32 to vector<16x64xf32>
    %62 = arith.maximumf %60, %61 : vector<16x64xf32>
    %c0_68 = arith.constant 0 : index
    %c0_69 = arith.constant 0 : index
    %c0_70 = arith.constant 0 : index
    %63 = vector.load %arg6[%c0_68, %c0_69, %c0_70] : memref<1x16x64xf32, #tpu.memory_space<vmem>>, vector<1x16x64xf32>
    %64 = vector.shape_cast %63 : vector<1x16x64xf32> to vector<16x64xf32>
    %65 = vector.shape_cast %62 : vector<16x64xf32> to vector<1x16x64xf32>
    tpu.vector_store %arg6[%c0_68, %c0_69, %c0_70], %65 {strides = array<i32>} : memref<1x16x64xf32, #tpu.memory_space<vmem>>, vector<1x16x64xf32>,
    return
  }
  func.func @transform_0(%arg0: i32) -> (i32, i32, i32) {
    %c0_i32 = arith.constant 0 : i32
    %c0_i32_0 = arith.constant 0 : i32
    %c0_i32_1 = arith.constant 0 : i32
    return %arg0, %c0_i32, %c0_i32_0 : i32, i32, i32
  }
  func.func @transform_1(%arg0: i32) -> (i32, i32, i32) {
    %c0_i32 = arith.constant 0 : i32
    %c0_i32_0 = arith.constant 0 : i32
    %c0_i32_1 = arith.constant 0 : i32
    %c0_i32_2 = arith.constant 0 : i32
    return %c0_i32, %c0_i32_0, %c0_i32_1 : i32, i32, i32
  }
  func.func @transform_2(%arg0: i32) -> (i32, i32, i32) {
    %c0_i32 = arith.constant 0 : i32
    %c0_i32_0 = arith.constant 0 : i32
    %c0_i32_1 = arith.constant 0 : i32
    %c0_i32_2 = arith.constant 0 : i32
    return %c0_i32, %c0_i32_0, %c0_i32_1 : i32, i32, i32
  }
  func.func @transform_3(%arg0: i32) -> (i32, i32) {
    %c0_i32 = arith.constant 0 : i32
    %c0_i32_0 = arith.constant 0 : i32
    %c0_i32_1 = arith.constant 0 : i32
    return %c0_i32, %c0_i32_0 : i32, i32
  }
  func.func @transform_4(%arg0: i32) -> (i32, i32) {
    %c0_i32 = arith.constant 0 : i32
    %c0_i32_0 = arith.constant 0 : i32
    %c0_i32_1 = arith.constant 0 : i32
    return %c0_i32, %c0_i32_0 : i32, i32
  }
  func.func @transform_5(%arg0: i32) -> (i32, i32, i32) {
    %c0_i32 = arith.constant 0 : i32
    %c0_i32_0 = arith.constant 0 : i32
    %c0_i32_1 = arith.constant 0 : i32
    return %arg0, %c0_i32, %c0_i32_0 : i32, i32, i32
  }
}

</mosaic_0001>

<llo_original>
// kernel: tpu_custom_call.1
$region0: #{tpu_custom_call.1}
  #allocation0 [shape = 'u32[]', space=smem, size = 0x4, offset = 0x4, fixed_abs, tag = 'smem constant byte address 0x4 - core index']
  #allocation1 [shape = 'u32[72,128]{1,0:T(1,128)}', space=vmem, size = 0x9000, scoped, tag = 'internal scratch']
  #allocation2 [shape = 'f32[18,72]{1,0:T(8,128)}', space=vmem, size = 0x3000, scoped, tag = 'scratch operand']
  #allocation3 [shape = 'f32[18,72]{1,0:T(8,128)}', space=vmem, size = 0x3000, scoped, tag = 'scratch operand']
  %s0 = inlined_call_operand.vmem [shape: f32[2,16,64], index: 0, kind: input, shape index: {}]
  %s1 = inlined_call_operand.vmem [shape: f32[3,72,64], index: 1, kind: input, shape index: {}]
  %s2 = inlined_call_operand.vmem [shape: f32[3,72,64], index: 2, kind: input, shape index: {}]
  %s3 = inlined_call_operand.vmem [shape: f32[1,64], index: 3, kind: input, shape index: {}]
  %s4 = inlined_call_operand.vmem [shape: f32[1,64], index: 4, kind: input, shape index: {}]
  %s5 = inlined_call_operand.hbm [shape: f32[2,16,64], index: 5, kind: output, shape index: {}]
  %s6 = sld [smem:[#allocation0]]
  $region53: #{tpu_custom_call.1} parent=0
    _
  %s8 = ssub.s32 1, %s6
  %s9 = scalar_select 0, %s8, %s6
  $region1: #{tpu_custom_call.1} parent=0
    #allocation4 [shape = 'u8[16384]{0}', space=vmem, size = 0x4000, scoped, tag = 'output window, operand 0']
    #allocation5 [shape = 's32[2]{0}', space=sflag, size = 0x8, scoped, tag = 'scoped memory for tpu_custom_call.1']
    %10 = vsyncpa [#allocation5], 0
    %s11 = scalar_lea.sflag [#allocation5], 1
    %12 = vsyncpa %s11, 0
    loop: start=0, step=1, limit=4
    $region2: #{tpu_custom_call.1} parent=1 // loop_pre_header
      _
    $region3: #{tpu_custom_call.1} parent=1 // loop_header
      %s14 = sphi 0, %s18
      %p15 = scmp.ge.s32.totalorder %s14, 4
      %s24 = sphi 0, %s26
      %s27 = sphi 0, %s24
      %s28 = sphi 0, %s27
      %s44 = sphi 0, %s28
      %s48 = sphi 0, %s48
      %s50 = sphi 0, %s48
      %s51 = sphi 0, %s50
      %s65 = sphi 0, %s51
      %s69 = sphi 0, %s69
      %s71 = sphi 0, %s69
      %s72 = sphi 0, %s71
      %s86 = sphi 0, %s72
      %s90 = sphi 0, %s90
      %s92 = sphi 0, %s90
      %s93 = sphi 0, %s92
      %s107 = sphi 0, %s93
      %s111 = sphi 0, %s111
      %s113 = sphi 0, %s111
      %s114 = sphi 0, %s113
      %s128 = sphi 0, %s114
      %s134 = sphi 0, %s136
      %s137 = sphi 0, %s134
      %s138 = sphi 0, %s137
      %s154 = sphi 0, %s138
    $region4: #{tpu_custom_call.1} parent=1 // loop_header_branch
      %17 = sbr.rel (%p15) target = $region8
    $region5: #{tpu_custom_call.1} parent=1 // loop_body
      %s19 = ssub.s32 %s14, 1
      %s20 = ssub.s32 %s14, 2
      %s21 = sadd.s32 %s14, 1
      %s22 = ssub.s32 %s14, %s21
      %p23 = scmp.eq.s32.totalorder %s22, 0
      %s25 = sadd.s32 %s24, 1
      %s26 = scalar_select %p23, %s24, %s25
      %p29 = pneg %p23
      %p30 = scmp.eq.s32.totalorder %s14, 1
      %p31 = por %p29, %p30
      %p32 = scmp.ne.s32.totalorder %s24, %s27
      %p33 = scmp.eq.s32.totalorder %s14, 0
      %p34 = por %p32, %p33
      %p35 = scmp.ne.s32.totalorder %s24, %s27
      %p36 = scmp.eq.s32.totalorder %s19, 1
      %p37 = por %p35, %p36
      %p38 = scmp.ne.s32.totalorder %s27, %s28
      %p39 = scmp.eq.s32.totalorder %s19, 0
      %p40 = por %p38, %p39
      %p41 = scmp.ne.s32.totalorder %s27, %s28
      %p42 = scmp.eq.s32.totalorder %s20, 1
      %p43 = por %p41, %p42
      %p45 = scmp.ne.s32.totalorder %s28, %s44
      %p46 = scmp.eq.s32.totalorder %s20, 0
      %p47 = por %p45, %p46
      %s49 = sadd.s32 %s48, 1
      %p52 = scmp.eq.s32.totalorder %s14, 1
      %p53 = scmp.ne.s32.totalorder %s48, %s50
      %p54 = scmp.eq.s32.totalorder %s14, 0
      %p55 = por %p53, %p54
      %p56 = scmp.ne.s32.totalorder %s48, %s50
      %p57 = scmp.eq.s32.totalorder %s19, 1
      %p58 = por %p56, %p57
      %p59 = scmp.ne.s32.totalorder %s50, %s51
      %p60 = scmp.eq.s32.totalorder %s19, 0
      %p61 = por %p59, %p60
      %p62 = scmp.ne.s32.totalorder %s50, %s51
      %p63 = scmp.eq.s32.totalorder %s20, 1
      %p64 = por %p62, %p63
      %p66 = scmp.ne.s32.totalorder %s51, %s65
      %p67 = scmp.eq.s32.totalorder %s20, 0
      %p68 = por %p66, %p67
      %s70 = sadd.s32 %s69, 1
      %p73 = scmp.eq.s32.totalorder %s14, 1
      %p74 = scmp.ne.s32.totalorder %s69, %s71
      %p75 = scmp.eq.s32.totalorder %s14, 0
      %p76 = por %p74, %p75
      %p77 = scmp.ne.s32.totalorder %s69, %s71
      %p78 = scmp.eq.s32.totalorder %s19, 1
      %p79 = por %p77, %p78
      %p80 = scmp.ne.s32.totalorder %s71, %s72
      %p81 = scmp.eq.s32.totalorder %s19, 0
      %p82 = por %p80, %p81
      %p83 = scmp.ne.s32.totalorder %s71, %s72
      %p84 = scmp.eq.s32.totalorder %s20, 1
      %p85 = por %p83, %p84
      %p87 = scmp.ne.s32.totalorder %s72, %s86
      %p88 = scmp.eq.s32.totalorder %s20, 0
      %p89 = por %p87, %p88
      %s91 = sadd.s32 %s90, 1
      %p94 = scmp.eq.s32.totalorder %s14, 1
      %p95 = scmp.ne.s32.totalorder %s90, %s92
      %p96 = scmp.eq.s32.totalorder %s14, 0
      %p97 = por %p95, %p96
      %p98 = scmp.ne.s32.totalorder %s90, %s92
      %p99 = scmp.eq.s32.totalorder %s19, 1
      %p100 = por %p98, %p99
      %p101 = scmp.ne.s32.totalorder %s92, %s93
      %p102 = scmp.eq.s32.totalorder %s19, 0
      %p103 = por %p101, %p102
      %p104 = scmp.ne.s32.totalorder %s92, %s93
      %p105 = scmp.eq.s32.totalorder %s20, 1
      %p106 = por %p104, %p105
      %p108 = scmp.ne.s32.totalorder %s93, %s107
      %p109 = scmp.eq.s32.totalorder %s20, 0
      %p110 = por %p108, %p109
      %s112 = sadd.s32 %s111, 1
      %p115 = scmp.eq.s32.totalorder %s14, 1
      %p116 = scmp.ne.s32.totalorder %s111, %s113
      %p117 = scmp.eq.s32.totalorder %s14, 0
      %p118 = por %p116, %p117
      %p119 = scmp.ne.s32.totalorder %s111, %s113
      %p120 = scmp.eq.s32.totalorder %s19, 1
      %p121 = por %p119, %p120
      %p122 = scmp.ne.s32.totalorder %s113, %s114
      %p123 = scmp.eq.s32.totalorder %s19, 0
      %p124 = por %p122, %p123
      %p125 = scmp.ne.s32.totalorder %s113, %s114
      %p126 = scmp.eq.s32.totalorder %s20, 1
      %p127 = por %p125, %p126
      %p129 = scmp.ne.s32.totalorder %s114, %s128
      %p130 = scmp.eq.s32.totalorder %s20, 0
      %p131 = por %p129, %p130
      %s132 = ssub.s32 %s14, %s21
      %p133 = scmp.eq.s32.totalorder %s132, 0
      %s135 = sadd.s32 %s134, 1
      %s136 = scalar_select %p133, %s134, %s135
      %p139 = pneg %p133
      %p140 = scmp.eq.s32.totalorder %s14, 1
      %p141 = por %p139, %p140
      %p142 = scmp.ne.s32.totalorder %s134, %s137
      %p143 = scmp.eq.s32.totalorder %s14, 0
      %p144 = por %p142, %p143
      %p145 = scmp.ne.s32.totalorder %s134, %s137
      %p146 = scmp.eq.s32.totalorder %s19, 1
      %p147 = por %p145, %p146
      %p148 = scmp.ne.s32.totalorder %s137, %s138
      %p149 = scmp.eq.s32.totalorder %s19, 0
      %p150 = por %p148, %p149
      %p151 = scmp.ne.s32.totalorder %s137, %s138
      %p152 = scmp.eq.s32.totalorder %s20, 1
      %p153 = por %p151, %p152
      %p155 = scmp.ne.s32.totalorder %s138, %s154
      %p156 = scmp.eq.s32.totalorder %s20, 0
      %p157 = por %p155, %p156
      %p158 = scmp.le.s32.totalorder 1, %s14
      %p159 = scmp.lt.s32.totalorder %s14, 3
      %p160 = pnand %p158, %p159
      %p161 = pneg %p160
      // Predicated region
      $region9: #{tpu_custom_call.1} parent=5 // pred_check
        _
      $region10: #{tpu_custom_call.1} parent=5 // pred_check_branch
        %163 = sbr.rel (%p160) target = $region12
      $region11: #{tpu_custom_call.1} parent=5 // pred_region
        %s164 = ssub.s32 %s14, 1
        // Predicated region
        $region13: #{tpu_custom_call.1} parent=11 // pred_check
          %p165 = pneg %p61
        $region14: #{tpu_custom_call.1} parent=11 // pred_check_branch
          %167 = sbr.rel (%p165) target = $region16
        $region15: #{tpu_custom_call.1} parent=11 // pred_region
          _
        $region16: #{tpu_custom_call.1} parent=11 // pred_fallthru
          _
        // Predicated region
        $region17: #{tpu_custom_call.1} parent=11 // pred_check
          %p168 = pneg %p82
        $region18: #{tpu_custom_call.1} parent=11 // pred_check_branch
          %170 = sbr.rel (%p168) target = $region20
        $region19: #{tpu_custom_call.1} parent=11 // pred_region
          _
        $region20: #{tpu_custom_call.1} parent=11 // pred_fallthru
          _
        // Predicated region
        $region21: #{tpu_custom_call.1} parent=11 // pred_check
          %p171 = pneg %p103
        $region22: #{tpu_custom_call.1} parent=11 // pred_check_branch
          %173 = sbr.rel (%p171) target = $region24
        $region23: #{tpu_custom_call.1} parent=11 // pred_region
          _
        $region24: #{tpu_custom_call.1} parent=11 // pred_fallthru
          _
        // Predicated region
        $region25: #{tpu_custom_call.1} parent=11 // pred_check
          %p174 = pneg %p124
        $region26: #{tpu_custom_call.1} parent=11 // pred_check_branch
          %176 = sbr.rel (%p174) target = $region28
        $region27: #{tpu_custom_call.1} parent=11 // pred_region
          _
        $region28: #{tpu_custom_call.1} parent=11 // pred_fallthru
          _
      $region12: #{tpu_custom_call.1} parent=5 // pred_fallthru
        _
      %p177 = scmp.lt.s32.totalorder %s14, 2
      // Predicated region
      $region29: #{tpu_custom_call.1} parent=5 // pred_check
        %p178 = pneg %p177
      $region30: #{tpu_custom_call.1} parent=5 // pred_check_branch
        %180 = sbr.rel (%p178) target = $region32
      $region31: #{tpu_custom_call.1} parent=5 // pred_region
        // Predicated region
        $region33: #{tpu_custom_call.1} parent=31 // pred_check
          %p181 = pneg %p34
        $region34: #{tpu_custom_call.1} parent=31 // pred_check_branch
          %183 = sbr.rel (%p181) target = $region36
        $region35: #{tpu_custom_call.1} parent=31 // pred_region
          %p184 = scmp.lt.s32.totalorder %s14, 1
          %s185 = scalar_select %p184, %s14, 1
          %s186 = smul.addr %s185, 2
          %s187 = smul.addr %s186, 8
          %s188 = scalar_lea.vmem %s0, %s187
        $region36: #{tpu_custom_call.1} parent=31 // pred_fallthru
          _
      $region32: #{tpu_custom_call.1} parent=5 // pred_fallthru
        _
      %p189 = scmp.le.s32.totalorder 1, %s14
      %p190 = scmp.lt.s32.totalorder %s14, 3
      %p191 = pnand %p189, %p190
      %p192 = pneg %p191
      // Predicated region
      $region37: #{tpu_custom_call.1} parent=5 // pred_check
        _
      $region38: #{tpu_custom_call.1} parent=5 // pred_check_branch
        %194 = sbr.rel (%p191) target = $region40
      $region39: #{tpu_custom_call.1} parent=5 // pred_region
        %s195 = ssub.s32 %s14, 1
        %p196 = scmp.lt.s32.totalorder %s19, 1
        %s197 = scalar_select %p196, %s19, 1
        %s198 = smul.addr %s197, 2
        %s199 = smul.addr %s198, 8
        %s200 = scalar_lea.vmem %s0, %s199
        %p201 = pneg %p40
        %p202 = pneg %p37
        %p203 = pneg %p61
        %p204 = pneg %p58
        %p205 = pneg %p82
        %p206 = pneg %p79
        %p207 = pneg %p103
        %p208 = pneg %p100
        %p209 = pneg %p124
        %p210 = pneg %p121
        %p211 = pneg %p150
        %p212 = pneg %p147
        %s213 = sand.u32 %s137, 1
        %s214 = scalar_lea.sflag [#allocation5], %s213
        %s215 = sand.u32 %s137, 1
        %s216 = smul.addr %s215, 16
        %s217 = scalar_lea.vmem [#allocation4], %s216
        %p218 = scmp.lt.s32.totalorder %s19, 1
        %s219 = scalar_select %p218, %s19, 1
        %s220 = smul.addr %s219, 2
        %s221 = smul.addr %s220, 8
        %s222 = scalar_lea.vmem %s0, %s221
        %vm223 = vcmask 581632
        %224 = vst.msk [vmem:[#allocation2] sm:$0x1] %vm223, 0.0
        %225 = vst.msk [vmem:[#allocation2 + $0x11] sm:$0x1] %vm223, 0.0
        %vm226 = vcmask 31744
        %227 = vst.msk [vmem:[#allocation2] sm:$0xff] %vm226, 0.0
        %228 = vst.msk [vmem:[#allocation2 + $0x8] sm:$0xff] %vm226, 0.0
        %vm229 = vcmask 25600
        %230 = vst.msk [vmem:[#allocation2 + $0x10] sm:$0x3] %vm229, 0.0
        %vm231 = vcmask 589344
        %232 = vst.msk [vmem:[#allocation2] sm:$0xff] %vm231, 0.0
        %233 = vst.msk [vmem:[#allocation2 + $0x8] sm:$0xff] %vm231, 0.0
        %vm234 = vcmask 583200
        %235 = vst.msk [vmem:[#allocation2 + $0x10] sm:$0x3] %vm234, 0.0
        %v236 = vld [vmem:[%s222] sm:$0xff]
        %v237 = vld [vmem:[%s222 + $0x8] sm:$0xff]
        %240 = vrot.lane.b32.xlu0 %v236, 4
        %v241 = vpop.permute.xlu0 %240
        %242 = vrot.lane.b32.xlu0 %v237, 4
        %v243 = vpop.permute.xlu0 %242
        %vm246 = vcmask 556064
        %247 = vst.msk [vmem:[#allocation2 + $0x1] sm:$0xff] %vm246, %v241
        %248 = vst.msk [vmem:[#allocation2 + $0x9] sm:$0xff] %vm246, %v243
        %v249 = vld [vmem:[#allocation2] sm:$0xff]
        %v250 = vld [vmem:[#allocation2 + $0x8] sm:$0xff]
        %v251 = vld [vmem:[%s1] sm:$0xff]
        %v252 = vld [vmem:[%s1 + $0x8] sm:$0xff]
        %v253 = vld [vmem:[%s1 + $0x10] sm:$0xff]
        %v254 = vld [vmem:[%s1 + $0x18] sm:$0xff]
        %v255 = vld [vmem:[%s1 + $0x20] sm:$0xff]
        %v256 = vld [vmem:[%s1 + $0x28] sm:$0xff]
        %v257 = vld [vmem:[%s1 + $0x30] sm:$0xff]
        %v258 = vld [vmem:[%s1 + $0x38] sm:$0xff]
        %v259 = vld [vmem:[%s1 + $0x40] sm:$0xff]
        %v260 = vld [vmem:[#allocation2 + $0x1] sm:$0xff]
        %v261 = vld [vmem:[#allocation2 + $0x9] sm:$0xff]
        %s262 = scalar_lea.vmem %s1, 72
        %v263 = vld [vmem:[%s262] sm:$0xff]
        %v264 = vld [vmem:[%s262 + $0x8] sm:$0xff]
        %v265 = vld [vmem:[%s262 + $0x10] sm:$0xff]
        %v266 = vld [vmem:[%s262 + $0x18] sm:$0xff]
        %v267 = vld [vmem:[%s262 + $0x20] sm:$0xff]
        %v268 = vld [vmem:[%s262 + $0x28] sm:$0xff]
        %v269 = vld [vmem:[%s262 + $0x30] sm:$0xff]
        %v270 = vld [vmem:[%s262 + $0x38] sm:$0xff]
        %v271 = vld [vmem:[%s262 + $0x40] sm:$0xff]
        %vm272 = vcmask 588800
        %v274 = vsel %vm272, %v260, 0
        %v277 = vsel %vm272, %v261, 0
        %279 = vmatpush.msra.mxu0 0.0
        %280 = vmatpush.msra.mxu0 0.0
        %281 = vmatpush.msra.mxu0 0.0
        %282 = vmatpush.msra.mxu0 0.0
        %283 = vmatpush.msra.mxu0 0.0
        %284 = vmatpush.msra.mxu0 0.0
        %285 = vmatpush.msra.mxu0 0.0
        %286 = vmatpush.msra.mxu0 %v271
        %287 = vmatpush.msra.mxu0 %v270
        %288 = vmatpush.msra.mxu0 %v269
        %289 = vmatpush.msra.mxu0 %v268
        %290 = vmatpush.msra.mxu0 %v267
        %291 = vmatpush.msra.mxu0 %v266
        %292 = vmatpush.msra.mxu0 %v265
        %293 = vmatpush.msra.mxu0 %v264
        %294 = vmatpush.msra.mxu0 %v263
        %295 = vmatmul.f32.gmra.mxu0 %v274
        %v296 = vpop.f32.mrf.mxu0
        %v297 = vadd.f32 0.0, %v296
        %298 = vmatmul.f32.gmra.mxu0 %v277
        %v299 = vpop.f32.mrf.mxu0
        %v300 = vadd.f32 0.0, %v299
        %301 = vdwg.mxu0
        %v303 = vsel %vm272, %v249, 0
        %v306 = vsel %vm272, %v250, 0
        %308 = vmatpush.msra.mxu0 0.0
        %309 = vmatpush.msra.mxu0 0.0
        %310 = vmatpush.msra.mxu0 0.0
        %311 = vmatpush.msra.mxu0 0.0
        %312 = vmatpush.msra.mxu0 0.0
        %313 = vmatpush.msra.mxu0 0.0
        %314 = vmatpush.msra.mxu0 0.0
        %315 = vmatpush.msra.mxu0 %v259
        %316 = vmatpush.msra.mxu0 %v258
        %317 = vmatpush.msra.mxu0 %v257
        %318 = vmatpush.msra.mxu0 %v256
        %319 = vmatpush.msra.mxu0 %v255
        %320 = vmatpush.msra.mxu0 %v254
        %321 = vmatpush.msra.mxu0 %v253
        %322 = vmatpush.msra.mxu0 %v252
        %323 = vmatpush.msra.mxu0 %v251
        %324 = vmatmul.f32.gmra.mxu0 %v303
        %v325 = vpop.f32.mrf.mxu0
        %v326 = vadd.f32 %v297, %v325
        %327 = vmatmul.f32.gmra.mxu0 %v306
        %v328 = vpop.f32.mrf.mxu0
        %v329 = vadd.f32 %v300, %v328
        %330 = vdwg.mxu0
        %v331 = vld [vmem:[#allocation2 + $0x2] sm:$0xff]
        %v332 = vld [vmem:[#allocation2 + $0xa] sm:$0xff]
        %s333 = scalar_lea.vmem %s1, 144
        %v334 = vld [vmem:[%s333] sm:$0xff]
        %v335 = vld [vmem:[%s333 + $0x8] sm:$0xff]
        %v336 = vld [vmem:[%s333 + $0x10] sm:$0xff]
        %v337 = vld [vmem:[%s333 + $0x18] sm:$0xff]
        %v338 = vld [vmem:[%s333 + $0x20] sm:$0xff]
        %v339 = vld [vmem:[%s333 + $0x28] sm:$0xff]
        %v340 = vld [vmem:[%s333 + $0x30] sm:$0xff]
        %v341 = vld [vmem:[%s333 + $0x38] sm:$0xff]
        %v342 = vld [vmem:[%s333 + $0x40] sm:$0xff]
        %v344 = vsel %vm272, %v331, 0
        %v347 = vsel %vm272, %v332, 0
        %349 = vmatpush.msra.mxu0 0.0
        %350 = vmatpush.msra.mxu0 0.0
        %351 = vmatpush.msra.mxu0 0.0
        %352 = vmatpush.msra.mxu0 0.0
        %353 = vmatpush.msra.mxu0 0.0
        %354 = vmatpush.msra.mxu0 0.0
        %355 = vmatpush.msra.mxu0 0.0
        %356 = vmatpush.msra.mxu0 %v342
        %357 = vmatpush.msra.mxu0 %v341
        %358 = vmatpush.msra.mxu0 %v340
        %359 = vmatpush.msra.mxu0 %v339
        %360 = vmatpush.msra.mxu0 %v338
        %361 = vmatpush.msra.mxu0 %v337
        %362 = vmatpush.msra.mxu0 %v336
        %363 = vmatpush.msra.mxu0 %v335
        %364 = vmatpush.msra.mxu0 %v334
        %365 = vmatmul.f32.gmra.mxu0 %v344
        %v366 = vpop.f32.mrf.mxu0
        %v367 = vadd.f32 0.0, %v366
        %368 = vmatmul.f32.gmra.mxu0 %v347
        %v369 = vpop.f32.mrf.mxu0
        %v370 = vadd.f32 0.0, %v369
        %371 = vdwg.mxu0
        %v372 = vadd.f32 %v326, %v367
        %v373 = vadd.f32 %v329, %v370
        %v374 = vld [vmem:[%s3] sm:$0x1]
        %v376 = vperm.slane %v374, 0
        %v378 = vadd.f32 %v372, %v376
        %v379 = vadd.f32 %v373, %v376
        %v380 = vmax.f32 %v378, 0.0
        %v381 = vmax.f32 %v379, 0.0
        %382 = vst.msk [vmem:[#allocation3] sm:$0x1] %vm223, 0.0
        %383 = vst.msk [vmem:[#allocation3 + $0x11] sm:$0x1] %vm223, 0.0
        %384 = vst.msk [vmem:[#allocation3] sm:$0xff] %vm226, 0.0
        %385 = vst.msk [vmem:[#allocation3 + $0x8] sm:$0xff] %vm226, 0.0
        %386 = vst.msk [vmem:[#allocation3 + $0x10] sm:$0x3] %vm229, 0.0
        %387 = vst.msk [vmem:[#allocation3] sm:$0xff] %vm231, 0.0
        %388 = vst.msk [vmem:[#allocation3 + $0x8] sm:$0xff] %vm231, 0.0
        %389 = vst.msk [vmem:[#allocation3 + $0x10] sm:$0x3] %vm234, 0.0
        %392 = vrot.lane.b32.xlu0 %v380, 4
        %v393 = vpop.permute.xlu0 %392
        %394 = vrot.lane.b32.xlu0 %v381, 4
        %v395 = vpop.permute.xlu0 %394
        %398 = vst.msk [vmem:[#allocation3 + $0x1] sm:$0xff] %vm246, %v393
        %399 = vst.msk [vmem:[#allocation3 + $0x9] sm:$0xff] %vm246, %v395
        %v400 = vld [vmem:[#allocation3] sm:$0xff]
        %v401 = vld [vmem:[#allocation3 + $0x8] sm:$0xff]
        %v402 = vld [vmem:[%s2] sm:$0xff]
        %v403 = vld [vmem:[%s2 + $0x8] sm:$0xff]
        %v404 = vld [vmem:[%s2 + $0x10] sm:$0xff]
        %v405 = vld [vmem:[%s2 + $0x18] sm:$0xff]
        %v406 = vld [vmem:[%s2 + $0x20] sm:$0xff]
        %v407 = vld [vmem:[%s2 + $0x28] sm:$0xff]
        %v408 = vld [vmem:[%s2 + $0x30] sm:$0xff]
        %v409 = vld [vmem:[%s2 + $0x38] sm:$0xff]
        %v410 = vld [vmem:[%s2 + $0x40] sm:$0xff]
        %v411 = vld [vmem:[#allocation3 + $0x1] sm:$0xff]
        %v412 = vld [vmem:[#allocation3 + $0x9] sm:$0xff]
        %s413 = scalar_lea.vmem %s2, 72
        %v414 = vld [vmem:[%s413] sm:$0xff]
        %v415 = vld [vmem:[%s413 + $0x8] sm:$0xff]
        %v416 = vld [vmem:[%s413 + $0x10] sm:$0xff]
        %v417 = vld [vmem:[%s413 + $0x18] sm:$0xff]
        %v418 = vld [vmem:[%s413 + $0x20] sm:$0xff]
        %v419 = vld [vmem:[%s413 + $0x28] sm:$0xff]
        %v420 = vld [vmem:[%s413 + $0x30] sm:$0xff]
        %v421 = vld [vmem:[%s413 + $0x38] sm:$0xff]
        %v422 = vld [vmem:[%s413 + $0x40] sm:$0xff]
        %v424 = vsel %vm272, %v411, 0
        %v427 = vsel %vm272, %v412, 0
        %429 = vmatpush.msra.mxu0 0.0
        %430 = vmatpush.msra.mxu0 0.0
        %431 = vmatpush.msra.mxu0 0.0
        %432 = vmatpush.msra.mxu0 0.0
        %433 = vmatpush.msra.mxu0 0.0
        %434 = vmatpush.msra.mxu0 0.0
        %435 = vmatpush.msra.mxu0 0.0
        %436 = vmatpush.msra.mxu0 %v422
        %437 = vmatpush.msra.mxu0 %v421
        %438 = vmatpush.msra.mxu0 %v420
        %439 = vmatpush.msra.mxu0 %v419
        %440 = vmatpush.msra.mxu0 %v418
        %441 = vmatpush.msra.mxu0 %v417
        %442 = vmatpush.msra.mxu0 %v416
        %443 = vmatpush.msra.mxu0 %v415
        %444 = vmatpush.msra.mxu0 %v414
        %445 = vmatmul.f32.gmra.mxu0 %v424
        %v446 = vpop.f32.mrf.mxu0
        %v447 = vadd.f32 0.0, %v446
        %448 = vmatmul.f32.gmra.mxu0 %v427
        %v449 = vpop.f32.mrf.mxu0
        %v450 = vadd.f32 0.0, %v449
        %451 = vdwg.mxu0
        %v453 = vsel %vm272, %v400, 0
        %v456 = vsel %vm272, %v401, 0
        %458 = vmatpush.msra.mxu0 0.0
        %459 = vmatpush.msra.mxu0 0.0
        %460 = vmatpush.msra.mxu0 0.0
        %461 = vmatpush.msra.mxu0 0.0
        %462 = vmatpush.msra.mxu0 0.0
        %463 = vmatpush.msra.mxu0 0.0
        %464 = vmatpush.msra.mxu0 0.0
        %465 = vmatpush.msra.mxu0 %v410
        %466 = vmatpush.msra.mxu0 %v409
        %467 = vmatpush.msra.mxu0 %v408
        %468 = vmatpush.msra.mxu0 %v407
        %469 = vmatpush.msra.mxu0 %v406
        %470 = vmatpush.msra.mxu0 %v405
        %471 = vmatpush.msra.mxu0 %v404
        %472 = vmatpush.msra.mxu0 %v403
        %473 = vmatpush.msra.mxu0 %v402
        %474 = vmatmul.f32.gmra.mxu0 %v453
        %v475 = vpop.f32.mrf.mxu0
        %v476 = vadd.f32 %v447, %v475
        %477 = vmatmul.f32.gmra.mxu0 %v456
        %v478 = vpop.f32.mrf.mxu0
        %v479 = vadd.f32 %v450, %v478
        %480 = vdwg.mxu0
        %v481 = vld [vmem:[#allocation3 + $0x2] sm:$0xff]
        %v482 = vld [vmem:[#allocation3 + $0xa] sm:$0xff]
        %s483 = scalar_lea.vmem %s2, 144
        %v484 = vld [vmem:[%s483] sm:$0xff]
        %v485 = vld [vmem:[%s483 + $0x8] sm:$0xff]
        %v486 = vld [vmem:[%s483 + $0x10] sm:$0xff]
        %v487 = vld [vmem:[%s483 + $0x18] sm:$0xff]
        %v488 = vld [vmem:[%s483 + $0x20] sm:$0xff]
        %v489 = vld [vmem:[%s483 + $0x28] sm:$0xff]
        %v490 = vld [vmem:[%s483 + $0x30] sm:$0xff]
        %v491 = vld [vmem:[%s483 + $0x38] sm:$0xff]
        %v492 = vld [vmem:[%s483 + $0x40] sm:$0xff]
        %v494 = vsel %vm272, %v481, 0
        %v497 = vsel %vm272, %v482, 0
        %499 = vmatpush.msra.mxu0 0.0
        %500 = vmatpush.msra.mxu0 0.0
        %501 = vmatpush.msra.mxu0 0.0
        %502 = vmatpush.msra.mxu0 0.0
        %503 = vmatpush.msra.mxu0 0.0
        %504 = vmatpush.msra.mxu0 0.0
        %505 = vmatpush.msra.mxu0 0.0
        %506 = vmatpush.msra.mxu0 %v492
        %507 = vmatpush.msra.mxu0 %v491
        %508 = vmatpush.msra.mxu0 %v490
        %509 = vmatpush.msra.mxu0 %v489
        %510 = vmatpush.msra.mxu0 %v488
        %511 = vmatpush.msra.mxu0 %v487
        %512 = vmatpush.msra.mxu0 %v486
        %513 = vmatpush.msra.mxu0 %v485
        %514 = vmatpush.msra.mxu0 %v484
        %515 = vmatmul.f32.gmra.mxu0 %v494
        %v516 = vpop.f32.mrf.mxu0
        %v517 = vadd.f32 0.0, %v516
        %518 = vmatmul.f32.gmra.mxu0 %v497
        %v519 = vpop.f32.mrf.mxu0
        %v520 = vadd.f32 0.0, %v519
        %521 = vdwg.mxu0
        %v522 = vadd.f32 %v476, %v517
        %v523 = vadd.f32 %v479, %v520
        %v524 = vld [vmem:[%s4] sm:$0x1]
        %v526 = vperm.slane %v524, 0
        %v528 = vadd.f32 %v522, %v526
        %v529 = vadd.f32 %v523, %v526
        %v530 = vadd.f32 %v528, %v236
        %v531 = vadd.f32 %v529, %v237
        %v532 = vmax.f32 %v530, 0.0
        %v533 = vmax.f32 %v531, 0.0
        %vm534 = vcmask 523264
        %535 = vst.msk [vmem:[%s217] sm:$0xff] %vm534, %v532
        %536 = vst.msk [vmem:[%s217 + $0x8] sm:$0xff] %vm534, %v533
        %s537 = sand.u32 %s137, 1
        %s538 = scalar_lea.sflag [#allocation5], %s537
        %s539 = sand.u32 %s137, 1
        %s540 = smul.addr %s539, 16
        %s541 = scalar_lea.vmem [#allocation4], %s540
        // Predicated region
        $region41: #{tpu_custom_call.1} parent=39 // pred_check
          %p542 = pneg %p147
        $region42: #{tpu_custom_call.1} parent=39 // pred_check_branch
          %544 = sbr.rel (%p542) target = $region44
        $region43: #{tpu_custom_call.1} parent=39 // pred_region
          %546 = vsyncadd %s538, 0
          %s547 = smul.addr %s19, 2
          %s548 = smul.addr %s547, 8
          %s549 = scalar_lea.hbm %s5, %s548
          %s550 = sshll.u32 %s541, 4
          %s551 = int_to_ptr.vmem [resolvable:$true] %s550
          %s552 = sshll.u32 %s549, 4
          %s553 = int_to_ptr.hbm [resolvable:$true] %s552
          %558 = dma.vmem_to_hbm [thread:$0]  %s551, 256, %s553, %s538, 128, 128, 8
        $region44: #{tpu_custom_call.1} parent=39 // pred_fallthru
          _
      $region40: #{tpu_custom_call.1} parent=5 // pred_fallthru
        _
      %p559 = scmp.le.s32.totalorder 2, %s14
      // Predicated region
      $region45: #{tpu_custom_call.1} parent=5 // pred_check
        %p560 = pneg %p559
      $region46: #{tpu_custom_call.1} parent=5 // pred_check_branch
        %562 = sbr.rel (%p560) target = $region48
      $region47: #{tpu_custom_call.1} parent=5 // pred_region
        %s563 = ssub.s32 %s14, 2
        // Predicated region
        $region49: #{tpu_custom_call.1} parent=47 // pred_check
          %p564 = pneg %p153
        $region50: #{tpu_custom_call.1} parent=47 // pred_check_branch
          %566 = sbr.rel (%p564) target = $region52
        $region51: #{tpu_custom_call.1} parent=47 // pred_region
          %s567 = sand.u32 %s138, 1
          %s568 = scalar_lea.sflag [#allocation5], %s567
          %s569 = sand.u32 %s138, 1
          %s570 = smul.addr %s569, 16
          %s571 = scalar_lea.vmem [#allocation4], %s570
          %573 = dma.done %s568, 256
        $region52: #{tpu_custom_call.1} parent=47 // pred_fallthru
          _
      $region48: #{tpu_custom_call.1} parent=5 // pred_fallthru
        _
    $region6: #{tpu_custom_call.1} parent=1 // loop_footer
      %s18 = sadd.s32 1, %s14
    $region7: #{tpu_custom_call.1} parent=1 // loop_footer_branch
      %13 = sbr.rel target = $region3
    $region8: #{tpu_custom_call.1} parent=1 // loop_exit
      _
    %574 = vsyncpa [#allocation5], 1
    %s575 = scalar_lea.sflag [#allocation5], 1
    %576 = vsyncpa %s575, 1

</llo_original>
